<compile_context>
chip_gen: v6e
topology: v6e:2x2x1
jax: 0.10.0
libtpu: 0.0.40
codegen_flags: <defaults>
</compile_context>

<pallas_src>
import jax
import jax.numpy as jnp
from jax.experimental import pallas as pl
from jax.experimental.pallas import tpu as pltpu

LN_EPS = 1e-6


def _round_up(x, m):
    return ((x + m - 1) // m) * m


# --------------------------------------------------------------------------- #
# Kernel bodies
# --------------------------------------------------------------------------- #
def _layer_norm(x, gamma, beta):
    # onmt.modules.LayerNorm: a_2 * (x - mean) / (std + eps) + b_2
    # torch .std() is unbiased (ddof=1); eps is added to std (not var).
    d = x.shape[-1]
    mean = jnp.mean(x, axis=-1, keepdims=True)
    xc = x - mean
    var = jnp.sum(xc * xc, axis=-1, keepdims=True) * jnp.float32(1.0 / max(d - 1, 1))
    inv = 1.0 / (jnp.sqrt(var) + LN_EPS)        # exact, narrow (bm,1) column
    return (xc * inv) * gamma + beta


def _ffn_kernel_resident(x_ref, gamma_ref, beta_ref, w1_ref, b1_ref, w2_ref, b2_ref,
                         o_ref):
    # One row tile; both bf16 weight matrices fully resident (single-buffered).
    x = x_ref[...].astype(jnp.float32)                               # (bm, size)
    normed = _layer_norm(x, gamma_ref[...], beta_ref[...]).astype(jnp.bfloat16)

    # w_1 -> bias -> ReLU (dropout_1 identity); bf16 MXU operands, f32 accumulate.
    h = jnp.dot(normed, w1_ref[...], preferred_element_type=jnp.float32) + b1_ref[...]
    h = jnp.maximum(h, 0.0).astype(jnp.bfloat16)                     # bf16 intermediate

    # w_2 -> bias (dropout_2 identity) + residual.
    out = jnp.dot(h, w2_ref[...], preferred_element_type=jnp.float32) + b2_ref[...]
    o_ref[...] = (out + x).astype(o_ref.dtype)


def _ffn_kernel_tiled(x_ref, gamma_ref, beta_ref, w1_ref, b1_ref, w2_ref, b2_ref,
                      o_ref, normed_sc, acc_sc):
    # 2-D grid: (row tiles, hidden chunks). Hidden axis is a reduction for the
    # second matmul -> accumulate into a (bm, size) f32 VMEM scratch.
    k = pl.program_id(1)

    @pl.when(k == 0)
    def _():
        x = x_ref[...].astype(jnp.float32)
        normed_sc[...] = _layer_norm(x, gamma_ref[...], beta_ref[...]).astype(jnp.bfloat16)
        acc_sc[...] = jnp.zeros_like(acc_sc)

    h = jnp.dot(normed_sc[...], w1_ref[...], preferred_element_type=jnp.float32) + b1_ref[...]
    h = jnp.maximum(h, 0.0).astype(jnp.bfloat16)
    acc_sc[...] += jnp.dot(h, w2_ref[...], preferred_element_type=jnp.float32)

    @pl.when(k == pl.num_programs(1) - 1)
    def _():
        out = acc_sc[...] + b2_ref[...] + x_ref[...].astype(jnp.float32)
        o_ref[...] = out.astype(o_ref.dtype)


# --------------------------------------------------------------------------- #
# Sizing / planning helpers
# --------------------------------------------------------------------------- #
def _vmem_budget_bytes():
    # ~85% of physical per-core VMEM: ~54 MiB on v7x (64 MiB/TC), ~109 MiB on v5e/v6e.
    try:
        cap = int(getattr(pltpu.get_tpu_info(), "vmem_capacity_bytes", 0)) or (64 << 20)
    except Exception:  # pragma: no cover - defensive; assume 64 MiB if query fails
        cap = 64 << 20
    return int(cap * 0.85)


def _resident_bytes(bm, size, hidden):
    w = 2 * size * hidden * 2                      # bf16 w1 + w2, single-buffered
    io = 2 * 2 * bm * size * 4                     # x / out tiles, double-buffered, f32
    params = 2 * (3 * size + hidden) * 4           # gamma, beta, b1, b2
    inter = bm * size * (4 + 2 + 4) + bm * hidden * (4 + 2)
    return w + io + params + inter + (2 << 20)


def _tiled_bytes(bm, size, tk):
    w = 2 * (2 * size * tk * 2)                    # w1/w2 chunks, bf16, double-buffered
    io = 2 * 2 * bm * size * 4
    params = 2 * (3 * size + tk) * 4
    scratch = bm * size * (4 + 2)                  # acc f32 + normed bf16
    inter = bm * tk * (4 + 2)
    return w + io + params + scratch + inter + (2 << 20)


def _select_plan(bm_max, size, hidden, budget):
    # 1) weights fully resident (single-buffered); shrink row tile only down to 128.
    bm = bm_max
    while True:
        if _resident_bytes(bm, size, hidden) <= budget:
            return "resident", bm, hidden
        if bm <= 128:
            break
        bm = max(128, _round_up(bm // 2, 8))

    # 2) hidden-tiled fallback: chunk candidates are multiple-of-128 divisors of hidden.
    cands = sorted((c for c in range(128, hidden + 1, 128) if hidden % c == 0),
                   reverse=True)
    bm = bm_max
    while cands:
        for tk in cands:
            if _tiled_bytes(bm, size, tk) <= budget:
                return "tiled", bm, tk
        if bm <= 8:
            break
        bm = max(8, _round_up(bm // 2, 8))

    # 3) last resort: smallest config, let the compiler decide.
    if cands:
        return "tiled", 8, cands[-1]
    return "resident", max(8, min(bm_max, 128)), hidden


# --------------------------------------------------------------------------- #
# Public wrapper
# --------------------------------------------------------------------------- #
def prepare_ffn_params(gamma, beta, w1, b1, w2, b2):
    """One-time parameter prep (hoisted out of the per-call hot path):
    weights -> bf16, LN params / biases -> f32."""
    return (jnp.asarray(gamma, jnp.float32),
            jnp.asarray(beta, jnp.float32),
            jnp.asarray(w1, jnp.bfloat16),
            jnp.asarray(b1, jnp.float32),
            jnp.asarray(w2, jnp.bfloat16),
            jnp.asarray(b2, jnp.float32))


def positionwise_ffn(x, gamma, beta, w1, b1, w2, b2, *, block_m=512, hidden_block=None):
    """x: [tokens, size]. Weights stored as [in, out] (transposed vs torch Linear)."""
    tokens, size = x.shape
    hidden = w1.shape[1]

    # bf16 MXU operands; no-op if params already prepared via prepare_ffn_params.
    w1b = w1 if w1.dtype == jnp.bfloat16 else w1.astype(jnp.bfloat16)
    w2b = w2 if w2.dtype == jnp.bfloat16 else w2.astype(jnp.bfloat16)
    gamma2 = jnp.asarray(gamma, jnp.float32).reshape(1, size)
    beta2 = jnp.asarray(beta, jnp.float32).reshape(1, size)
    b1_2 = jnp.asarray(b1, jnp.float32).reshape(1, hidden)
    b2_2 = jnp.asarray(b2, jnp.float32).reshape(1, size)

    budget = _vmem_budget_bytes()
    bm_max = max(8, min(_round_up(block_m, 8), _round_up(tokens, 8)))
    if hidden_block is not None:
        assert hidden % int(hidden_block) == 0, "hidden_block must divide hidden"
        mode, bm, tk = "tiled", bm_max, int(hidden_block)
    else:
        mode, bm, tk = _select_plan(bm_max, size, hidden, budget)

    grid_rows = pl.cdiv(tokens, bm)   # ragged last row block handled by Pallas (no jnp.pad)
    once = pl.Buffered(1)             # constant-index operands: single VMEM buffer

    cost = pl.CostEstimate(
        flops=4 * tokens * size * hidden,            # two matmuls, 2*M*K*N each
        transcendentals=2 * tokens,                  # sqrt + reciprocal per row
        bytes_accessed=2 * tokens * size * 4 + 2 * size * hidden * 2,
    )

    if mode == "resident":
        grid = (grid_rows,)
        in_specs = [
            pl.BlockSpec((bm, size), lambda i: (i, 0)),                           # x
            pl.BlockSpec((1, size), lambda i: (0, 0), pipeline_mode=once),        # gamma
            pl.BlockSpec((1, size), lambda i: (0, 0), pipeline_mode=once),        # beta
            pl.BlockSpec((size, hidden), lambda i: (0, 0), pipeline_mode=once),   # w1
            pl.BlockSpec((1, hidden), lambda i: (0, 0), pipeline_mode=once),      # b1
            pl.BlockSpec((hidden, size), lambda i: (0, 0), pipeline_mode=once),   # w2
            pl.BlockSpec((1, size), lambda i: (0, 0), pipeline_mode=once),        # b2
        ]
        out_specs = pl.BlockSpec((bm, size), lambda i: (i, 0))
        scratch_shapes = []
        kernel = _ffn_kernel_resident
        dims = ("parallel",)
        needed = _resident_bytes(bm, size, hidden)
    else:
        grid = (grid_rows, hidden // tk)
        in_specs = [
            pl.BlockSpec((bm, size), lambda i, k: (i, 0)),                        # x
            pl.BlockSpec((1, size), lambda i, k: (0, 0), pipeline_mode=once),     # gamma
            pl.BlockSpec((1, size), lambda i, k: (0, 0), pipeline_mode=once),     # beta
            pl.BlockSpec((size, tk), lambda i, k: (0, k)),                        # w1 cols
            pl.BlockSpec((1, tk), lambda i, k: (0, k)),                           # b1 chunk
            pl.BlockSpec((tk, size), lambda i, k: (k, 0)),                        # w2 rows
            pl.BlockSpec((1, size), lambda i, k: (0, 0), pipeline_mode=once),     # b2
        ]
        out_specs = pl.BlockSpec((bm, size), lambda i, k: (i, 0))
        scratch_shapes = [pltpu.VMEM((bm, size), jnp.bfloat16),   # normed (LN output)
                          pltpu.VMEM((bm, size), jnp.float32)]    # second-matmul accumulator
        kernel = _ffn_kernel_tiled
        dims = ("parallel", "arbitrary")
        needed = _tiled_bytes(bm, size, tk)

    vmem_limit = int(min(budget, max(int(needed * 1.5), 32 << 20)))

    return pl.pallas_call(
        kernel,
        out_shape=jax.ShapeDtypeStruct((tokens, size), x.dtype),
        grid_spec=pltpu.PrefetchScalarGridSpec(
            num_scalar_prefetch=0,
            grid=grid,
            in_specs=in_specs,
            out_specs=out_specs,
            scratch_shapes=scratch_shapes,
        ),
        compiler_params=pltpu.CompilerParams(
            dimension_semantics=dims,
            vmem_limit_bytes=vmem_limit,
        ),
        cost_estimate=cost,
    )(x, gamma2, beta2, w1b, b1_2, w2b, b2_2)


# --------------------------------------------------------------------------- #
# Reference / test harness
# --------------------------------------------------------------------------- #
def init_params(key, size, hidden):
    """Deterministic init mimicking nn.Linear default (uniform +-1/sqrt(fan_in))."""
    k1, k2, k3, k4 = jax.random.split(key, 4)
    lim1 = 1.0 / jnp.sqrt(size)
    lim2 = 1.0 / jnp.sqrt(hidden)
    w1 = jax.random.uniform(k1, (size, hidden), jnp.float32, -lim1, lim1)
    b1 = jax.random.uniform(k2, (hidden,), jnp.float32, -lim1, lim1)
    w2 = jax.random.uniform(k3, (hidden, size), jnp.float32, -lim2, lim2)
    b2 = jax.random.uniform(k4, (size,), jnp.float32, -lim2, lim2)
    gamma = jnp.ones((size,), jnp.float32)   # LayerNorm a_2
    beta = jnp.zeros((size,), jnp.float32)   # LayerNorm b_2
    return gamma, beta, w1, b1, w2, b2


def reference_ffn(x, gamma, beta, w1, b1, w2, b2):
    # Pure f32 reference (kernel uses bf16 MXU operands, so tolerance is loosened).
    x32 = x.astype(jnp.float32)
    d = x32.shape[-1]
    mean = jnp.mean(x32, -1, keepdims=True)
    var = jnp.sum((x32 - mean) ** 2, -1, keepdims=True) / (d - 1)
    normed = gamma * (x32 - mean) / (jnp.sqrt(var) + LN_EPS) + beta
    h = jnp.maximum(normed @ w1 + b1, 0.0)
    return (h @ w2 + b2 + x32).astype(x.dtype)


if __name__ == "__main__":
    batch, seq, size, hidden = 2, 8, 32, 64
    key = jax.random.PRNGKey(0)
    kx, kp = jax.random.split(key)

    x3d = jax.random.normal(kx, (batch, seq, size), jnp.float32)
    x = x3d.reshape(batch * seq, size)   # layout: [tokens, size]

    raw = init_params(kp, size, hidden)
    params = prepare_ffn_params(*raw)    # bf16 weight conversion done ONCE, off the hot path

    # Path 1: weights-resident (the common case).
    out = positionwise_ffn(x, *params, block_m=512)
    out = jax.block_until_ready(out)
    ref = reference_ffn(x, *raw)
    assert out.shape == (batch * seq, size)
    assert jnp.allclose(out, ref, atol=5e-2, rtol=5e-2), "resident path mismatch"
    _ = out.reshape(batch, seq, size)    # restore original [batch, seq, size] view

    # Path 2: exercise the hidden-tiled accumulator fallback at small scale.
    size2, hidden2 = 128, 256
    kx2, kp2 = jax.random.split(jax.random.PRNGKey(1))
    x2 = jax.random.normal(kx2, (batch * seq, size2), jnp.float32)
    raw2 = init_params(kp2, size2, hidden2)
    p2 = prepare_ffn_params(*raw2)
    out2 = jax.block_until_ready(
        positionwise_ffn(x2, *p2, block_m=512, hidden_block=128))
    ref2 = reference_ffn(x2, *raw2)
    assert jnp.allclose(out2, ref2, atol=5e-2, rtol=5e-2), "tiled path mismatch"

    print("KERNEL_OK")
</pallas_src>

<mosaic_0001>
module attributes {stable_mosaic.version = 11 : i64} {
  func.func @_ffn_kernel_resident(%arg0: i32, %arg1: memref<16x32xf32, #tpu.memory_space<vmem>>, %arg2: memref<1x32xf32, #tpu.memory_space<vmem>>, %arg3: memref<1x32xf32, #tpu.memory_space<vmem>>, %arg4: memref<32x64xbf16, #tpu.memory_space<vmem>>, %arg5: memref<1x64xf32, #tpu.memory_space<vmem>>, %arg6: memref<64x32xbf16, #tpu.memory_space<vmem>>, %arg7: memref<1x32xf32, #tpu.memory_space<vmem>>, %arg8: memref<16x32xf32, #tpu.memory_space<vmem>>) attributes {dimension_semantics = [#tpu.dimension_semantics<parallel>], iteration_bounds = array<i64: 1>, scalar_prefetch = 0 : i64, scratch_operands = 0 : i64, tpu.core_type = #tpu.core_type<tc>, window_params = [{transform_indices = @transform_0, window_bounds = array<i64: 16, 32>}, {pipeline_mode = #tpu.pipeline_mode<synchronous>, transform_indices = @transform_1, window_bounds = array<i64: 1, 32>}, {pipeline_mode = #tpu.pipeline_mode<synchronous>, transform_indices = @transform_2, window_bounds = array<i64: 1, 32>}, {pipeline_mode = #tpu.pipeline_mode<synchronous>, transform_indices = @transform_3, window_bounds = array<i64: 32, 64>}, {pipeline_mode = #tpu.pipeline_mode<synchronous>, transform_indices = @transform_4, window_bounds = array<i64: 1, 64>}, {pipeline_mode = #tpu.pipeline_mode<synchronous>, transform_indices = @transform_5, window_bounds = array<i64: 64, 32>}, {pipeline_mode = #tpu.pipeline_mode<synchronous>, transform_indices = @transform_6, window_bounds = array<i64: 1, 32>}, {transform_indices = @transform_7, window_bounds = array<i64: 16, 32>}]} {
    %c0 = arith.constant 0 : index
    %c0_0 = arith.constant 0 : index
    %0 = vector.load %arg1[%c0, %c0_0] : memref<16x32xf32, #tpu.memory_space<vmem>>, vector<16x32xf32>
    %c0_1 = arith.constant 0 : index
    %c0_2 = arith.constant 0 : index
    %1 = vector.load %arg2[%c0_1, %c0_2] : memref<1x32xf32, #tpu.memory_space<vmem>>, vector<1x32xf32>
    %c0_3 = arith.constant 0 : index
    %c0_4 = arith.constant 0 : index
    %2 = vector.load %arg3[%c0_3, %c0_4] : memref<1x32xf32, #tpu.memory_space<vmem>>, vector<1x32xf32>
    %cst = arith.constant dense<0.000000e+00> : vector<16xf32>
    %3 = vector.multi_reduction <add>, %0, %cst [1] : vector<16x32xf32> to vector<16xf32>
    %4 = vector.shape_cast %3 : vector<16xf32> to vector<16x1xf32>
    %cst_5 = arith.constant 3.200000e+01 : f32
    %5 = vector.broadcast %cst_5 : f32 to vector<16x1xf32>
    %6 = arith.divf %4, %5 : vector<16x1xf32>
    %7 = vector.broadcast %6 : vector<16x1xf32> to vector<16x32xf32>
    %8 = arith.subf %0, %7 : vector<16x32xf32>
    %9 = arith.mulf %8, %8 : vector<16x32xf32>
    %cst_6 = arith.constant dense<0.000000e+00> : vector<16xf32>
    %10 = vector.multi_reduction <add>, %9, %cst_6 [1] : vector<16x32xf32> to vector<16xf32>
    %11 = vector.shape_cast %10 : vector<16xf32> to vector<16x1xf32>
    %cst_7 = arith.constant 0.0322580636 : f32
    %12 = vector.broadcast %cst_7 : f32 to vector<16x1xf32>
    %13 = arith.mulf %11, %12 : vector<16x1xf32>
    %14 = math.sqrt %13 : vector<16x1xf32>
    %cst_8 = arith.constant 9.99999997E-7 : f32
    %15 = vector.broadcast %cst_8 : f32 to vector<16x1xf32>
    %16 = arith.addf %14, %15 : vector<16x1xf32>
    %cst_9 = arith.constant 1.000000e+00 : f32
    %17 = vector.broadcast %cst_9 : f32 to vector<16x1xf32>
    %18 = arith.divf %17, %16 : vector<16x1xf32>
    %19 = vector.broadcast %18 : vector<16x1xf32> to vector<16x32xf32>
    %20 = arith.mulf %8, %19 : vector<16x32xf32>
    %21 = vector.broadcast %1 : vector<1x32xf32> to vector<16x32xf32>
    %22 = arith.mulf %20, %21 : vector<16x32xf32>
    %23 = vector.broadcast %2 : vector<1x32xf32> to vector<16x32xf32>
    %24 = arith.addf %22, %23 : vector<16x32xf32>
    %25 = arith.truncf %24 : vector<16x32xf32> to vector<16x32xbf16>
    %c0_10 = arith.constant 0 : index
    %c0_11 = arith.constant 0 : index
    %26 = vector.load %arg4[%c0_10, %c0_11] : memref<32x64xbf16, #tpu.memory_space<vmem>>, vector<32x64xbf16>
    %cst_12 = arith.constant dense<0.000000e+00> : vector<16x64xf32>
    %27 = tpu.matmul %25, %26, %cst_12 {dimension_numbers = #tpu.dot_dimension_numbers<[1], [0], [0], [1], [0, 0, 1, 1], [], []>} : vector<16x32xbf16>, vector<32x64xbf16>, vector<16x64xf32> -> vector<16x64xf32>
    %c0_13 = arith.constant 0 : index
    %c0_14 = arith.constant 0 : index
    %28 = vector.load %arg5[%c0_13, %c0_14] : memref<1x64xf32, #tpu.memory_space<vmem>>, vector<1x64xf32>
    %29 = vector.broadcast %28 : vector<1x64xf32> to vector<16x64xf32>
    %30 = arith.addf %27, %29 : vector<16x64xf32>
    %cst_15 = arith.constant 0.000000e+00 : f32
    %31 = vector.broadcast %cst_15 : f32 to vector<16x64xf32>
    %32 = arith.maximumf %30, %31 : vector<16x64xf32>
    %33 = arith.truncf %32 : vector<16x64xf32> to vector<16x64xbf16>
    %c0_16 = arith.constant 0 : index
    %c0_17 = arith.constant 0 : index
    %34 = vector.load %arg6[%c0_16, %c0_17] : memref<64x32xbf16, #tpu.memory_space<vmem>>, vector<64x32xbf16>
    %cst_18 = arith.constant dense<0.000000e+00> : vector<16x32xf32>
    %35 = tpu.matmul %33, %34, %cst_18 {dimension_numbers = #tpu.dot_dimension_numbers<[1], [0], [0], [1], [0, 0, 1, 1], [], []>} : vector<16x64xbf16>, vector<64x32xbf16>, vector<16x32xf32> -> vector<16x32xf32>
    %c0_19 = arith.constant 0 : index
    %c0_20 = arith.constant 0 : index
    %36 = vector.load %arg7[%c0_19, %c0_20] : memref<1x32xf32, #tpu.memory_space<vmem>>, vector<1x32xf32>
    %37 = vector.broadcast %36 : vector<1x32xf32> to vector<16x32xf32>
    %38 = arith.addf %35, %37 : vector<16x32xf32>
    %39 = arith.addf %38, %0 : vector<16x32xf32>
    %c0_21 = arith.constant 0 : index
    %c0_22 = arith.constant 0 : index
    %40 = vector.load %arg8[%c0_21, %c0_22] : memref<16x32xf32, #tpu.memory_space<vmem>>, vector<16x32xf32>
    tpu.vector_store %arg8[%c0_21, %c0_22], %39 {strides = array<i32>} : memref<16x32xf32, #tpu.memory_space<vmem>>, vector<16x32xf32>,
    return
  }
  func.func @transform_0(%arg0: i32) -> (i32, i32) {
    %c0_i32 = arith.constant 0 : i32
    %c0_i32_0 = arith.constant 0 : i32
    return %arg0, %c0_i32 : i32, i32
  }
  func.func @transform_1(%arg0: i32) -> (i32, i32) {
    %c0_i32 = arith.constant 0 : i32
    %c0_i32_0 = arith.constant 0 : i32
    %c0_i32_1 = arith.constant 0 : i32
    return %c0_i32, %c0_i32_0 : i32, i32
  }
  func.func @transform_2(%arg0: i32) -> (i32, i32) {
    %c0_i32 = arith.constant 0 : i32
    %c0_i32_0 = arith.constant 0 : i32
    %c0_i32_1 = arith.constant 0 : i32
    return %c0_i32, %c0_i32_0 : i32, i32
  }
  func.func @transform_3(%arg0: i32) -> (i32, i32) {
    %c0_i32 = arith.constant 0 : i32
    %c0_i32_0 = arith.constant 0 : i32
    %c0_i32_1 = arith.constant 0 : i32
    return %c0_i32, %c0_i32_0 : i32, i32
  }
  func.func @transform_4(%arg0: i32) -> (i32, i32) {
    %c0_i32 = arith.constant 0 : i32
    %c0_i32_0 = arith.constant 0 : i32
    %c0_i32_1 = arith.constant 0 : i32
    return %c0_i32, %c0_i32_0 : i32, i32
  }
  func.func @transform_5(%arg0: i32) -> (i32, i32) {
    %c0_i32 = arith.constant 0 : i32
    %c0_i32_0 = arith.constant 0 : i32
    %c0_i32_1 = arith.constant 0 : i32
    return %c0_i32, %c0_i32_0 : i32, i32
  }
  func.func @transform_6(%arg0: i32) -> (i32, i32) {
    %c0_i32 = arith.constant 0 : i32
    %c0_i32_0 = arith.constant 0 : i32
    %c0_i32_1 = arith.constant 0 : i32
    return %c0_i32, %c0_i32_0 : i32, i32
  }
  func.func @transform_7(%arg0: i32) -> (i32, i32) {
    %c0_i32 = arith.constant 0 : i32
    %c0_i32_0 = arith.constant 0 : i32
    return %arg0, %c0_i32 : i32, i32
  }
}

</mosaic_0001>

<llo_original>
// kernel: tpu_custom_call.1
$region0: #{tpu_custom_call.1}
  #allocation0 [shape = 'u32[]', space=smem, size = 0x4, offset = 0x4, fixed_abs, tag = 'smem constant byte address 0x4 - core index']
  #allocation1 [shape = 'u32[144,128]{1,0:T(1,128)}', space=vmem, size = 0x12000, scoped, tag = 'internal scratch']
  %s0 = inlined_call_operand.vmem [shape: f32[16,32], index: 0, kind: input, shape index: {}]
  %s1 = inlined_call_operand.vmem [shape: f32[1,32], index: 1, kind: input, shape index: {}]
  %s2 = inlined_call_operand.vmem [shape: f32[1,32], index: 2, kind: input, shape index: {}]
  %s3 = inlined_call_operand.vmem [shape: bf16[32,64], index: 3, kind: input, shape index: {}]
  %s4 = inlined_call_operand.vmem [shape: f32[1,64], index: 4, kind: input, shape index: {}]
  %s5 = inlined_call_operand.vmem [shape: bf16[64,32], index: 5, kind: input, shape index: {}]
  %s6 = inlined_call_operand.vmem [shape: f32[1,32], index: 6, kind: input, shape index: {}]
  %s7 = inlined_call_operand.hbm [shape: f32[16,32], index: 7, kind: output, shape index: {}]
  %s8 = sld [smem:[#allocation0]]
  $region38: #{tpu_custom_call.1} parent=0
    _
  %s10 = ssub.s32 1, %s8
  %s11 = scalar_select 0, %s10, %s8
  $region1: #{tpu_custom_call.1} parent=0
    #allocation2 [shape = 'u8[8192]{0}', space=vmem, size = 0x2000, scoped, tag = 'output window, operand 0, single buffered']
    #allocation3 [shape = 's32[1]{0}', space=sflag, size = 0x4, scoped, tag = 'scoped memory for tpu_custom_call.1']
    %12 = vsyncpa [#allocation3], 0
    // Predicated region
    $region2: #{tpu_custom_call.1} parent=1 // pred_check
      _
    $region3: #{tpu_custom_call.1} parent=1 // pred_check_branch
      %14 = sbr.rel (0) target = $region5
    $region4: #{tpu_custom_call.1} parent=1 // pred_region
      _
    $region5: #{tpu_custom_call.1} parent=1 // pred_fallthru
      _
    // Predicated region
    $region6: #{tpu_custom_call.1} parent=1 // pred_check
      _
    $region7: #{tpu_custom_call.1} parent=1 // pred_check_branch
      %16 = sbr.rel (0) target = $region9
    $region8: #{tpu_custom_call.1} parent=1 // pred_region
      _
    $region9: #{tpu_custom_call.1} parent=1 // pred_fallthru
      _
    // Predicated region
    $region10: #{tpu_custom_call.1} parent=1 // pred_check
      _
    $region11: #{tpu_custom_call.1} parent=1 // pred_check_branch
      %18 = sbr.rel (0) target = $region13
    $region12: #{tpu_custom_call.1} parent=1 // pred_region
      _
    $region13: #{tpu_custom_call.1} parent=1 // pred_fallthru
      _
    // Predicated region
    $region14: #{tpu_custom_call.1} parent=1 // pred_check
      _
    $region15: #{tpu_custom_call.1} parent=1 // pred_check_branch
      %20 = sbr.rel (0) target = $region17
    $region16: #{tpu_custom_call.1} parent=1 // pred_region
      _
    $region17: #{tpu_custom_call.1} parent=1 // pred_fallthru
      _
    // Predicated region
    $region18: #{tpu_custom_call.1} parent=1 // pred_check
      _
    $region19: #{tpu_custom_call.1} parent=1 // pred_check_branch
      %22 = sbr.rel (0) target = $region21
    $region20: #{tpu_custom_call.1} parent=1 // pred_region
      _
    $region21: #{tpu_custom_call.1} parent=1 // pred_fallthru
      _
    // Predicated region
    $region22: #{tpu_custom_call.1} parent=1 // pred_check
      _
    $region23: #{tpu_custom_call.1} parent=1 // pred_check_branch
      %24 = sbr.rel (0) target = $region25
    $region24: #{tpu_custom_call.1} parent=1 // pred_region
      _
    $region25: #{tpu_custom_call.1} parent=1 // pred_fallthru
      _
    // Predicated region
    $region26: #{tpu_custom_call.1} parent=1 // pred_check
      _
    $region27: #{tpu_custom_call.1} parent=1 // pred_check_branch
      %26 = sbr.rel (0) target = $region29
    $region28: #{tpu_custom_call.1} parent=1 // pred_region
      _
    $region29: #{tpu_custom_call.1} parent=1 // pred_fallthru
      _
    %v28 = vld [vmem:[%s0] sm:$0xff]
    %v29 = vld [vmem:[%s0 + $0x8] sm:$0xff]
    %v30 = vld [vmem:[%s1] sm:$0x1]
    %v31 = vld [vmem:[%s2] sm:$0x1]
    %vm32 = vcmask 261120
    %v33 = vsel %vm32, %v28, 0.0
    %34 = vadd.xlane.f32.xlu0 %v33
    %v35 = vpop.xlane.xlu0 %34
    %v36 = vsel %vm32, %v29, 0.0
    %37 = vadd.xlane.f32.xlu0 %v36
    %v38 = vpop.xlane.xlu0 %37
    %v39 = vrcp.pop 32.0
    %v40 = vmul.f32 %v35, %v39
    %v41 = vmul.f32 %v38, %v39
    %v42 = vsub.f32 %v28, %v40
    %v43 = vsub.f32 %v29, %v41
    %v44 = vmul.f32 %v42, %v42
    %v45 = vmul.f32 %v43, %v43
    %v46 = vsel %vm32, %v44, 0.0
    %47 = vadd.xlane.f32.xlu0 %v46
    %v48 = vpop.xlane.xlu0 %47
    %v49 = vsel %vm32, %v45, 0.0
    %50 = vadd.xlane.f32.xlu0 %v49
    %v51 = vpop.xlane.xlu0 %50
    %v52 = vmul.f32 %v48, 0.032258064
    %v53 = vmul.f32 %v51, 0.032258064
    %v54 = vrsqrt.pop %v52
    %v55 = vmul.f32 %v52, %v54
    %vm56 = vcmp.eq.f32.partialorder %v52, inf
    %v57 = vsel %vm56, %v52, %v55
    %vm58 = vcmp.eq.f32.partialorder %v52, 0.0
    %v59 = vand.u32 %v52, 2147483648
    %v60 = vsel %vm58, %v59, %v57
    %v61 = vrsqrt.pop %v53
    %v62 = vmul.f32 %v53, %v61
    %vm63 = vcmp.eq.f32.partialorder %v53, inf
    %v64 = vsel %vm63, %v53, %v62
    %vm65 = vcmp.eq.f32.partialorder %v53, 0.0
    %v66 = vand.u32 %v53, 2147483648
    %v67 = vsel %vm65, %v66, %v64
    %v68 = vadd.f32 %v60, 1e-06
    %v69 = vadd.f32 %v67, 1e-06
    %v70 = vrcp.pop %v68
    %v71 = vmul.f32 1.0, %v70
    %v72 = vrcp.pop %v69
    %v73 = vmul.f32 1.0, %v72
    %v74 = vmul.f32 %v42, %v71
    %v75 = vmul.f32 %v43, %v73
    %v77 = vlaneseq
    %v78 = vshrl.u32 %v77, 7
    %v79 = vsub.s32 0, %v78
    %v80 = vrot.slane %v30, %v79
    %v82 = vmul.f32 %v74, %v80
    %v83 = vmul.f32 %v75, %v80
    %v85 = vlaneseq
    %v86 = vshrl.u32 %v85, 7
    %v87 = vsub.s32 0, %v86
    %v88 = vrot.slane %v31, %v87
    %v90 = vadd.f32 %v82, %v88
    %v91 = vadd.f32 %v83, %v88
    %v92 = vpack.c.bf16 %v91, %v90
    %v93 = vld [vmem:[%s3] sm:$0xf]
    %v94 = vld [vmem:[%s3 + $0x4] sm:$0xf]
    %v95 = vld [vmem:[%s3 + $0x8] sm:$0xf]
    %v96 = vld [vmem:[%s3 + $0xc] sm:$0xf]
    %v97 = vld [vmem:[%s4] sm:$0x1]
    %v99 = vlaneseq
    %v100 = vshrl.u32 %v99, 7
    %v101 = vsub.s32 0, %v100
    %v102 = vrot.slane %v97, %v101
    %v108 = vunpack.c.l.b16 %v93
    %v109 = vunpack.c.l.b16 %v94
    %v110 = vunpack.c.l.b16 %v95
    %v111 = vunpack.c.l.b16 %v96
    %v112 = vpack.c.b16 %v109, %v108
    %v113 = vpack.c.b16 %v111, %v110
    %v117 = vsel %vm32, %v92, 0
    %119 = vmatprep.subr.bf16.mxu0 0
    %120 = vmatpush1.bf16.msra.mxu0 0
    %121 = vmatprep.subr.bf16.mxu0 0
    %122 = vmatpush1.bf16.msra.mxu0 0
    %123 = vmatprep.subr.bf16.mxu0 0
    %124 = vmatpush1.bf16.msra.mxu0 0
    %125 = vmatprep.subr.bf16.mxu0 0
    %126 = vmatpush1.bf16.msra.mxu0 0
    %127 = vmatprep.subr.bf16.mxu0 0
    %128 = vmatpush1.bf16.msra.mxu0 0
    %129 = vmatprep.subr.bf16.mxu0 0
    %130 = vmatpush1.bf16.msra.mxu0 0
    %131 = vmatprep.subr.bf16.mxu0 0
    %132 = vmatpush1.bf16.msra.mxu0 %v113
    %133 = vmatprep.subr.bf16.mxu0 0
    %134 = vmatpush1.bf16.msra.mxu0 %v112
    %135 = vmatprep.subr.bf16.mxu0 0
    %136 = vmatpush2.bf16.msra.mxu0 0
    %137 = vmatprep.subr.bf16.mxu0 0
    %138 = vmatpush2.bf16.msra.mxu0 0
    %139 = vmatprep.subr.bf16.mxu0 0
    %140 = vmatpush2.bf16.msra.mxu0 0
    %141 = vmatprep.subr.bf16.mxu0 0
    %142 = vmatpush2.bf16.msra.mxu0 0
    %143 = vmatprep.subr.bf16.mxu0 0
    %144 = vmatpush2.bf16.msra.mxu0 0
    %145 = vmatprep.subr.bf16.mxu0 0
    %146 = vmatpush2.bf16.msra.mxu0 0
    %147 = vmatprep.subr.bf16.mxu0 0
    %148 = vmatpush2.bf16.msra.mxu0 0
    %149 = vmatprep.subr.bf16.mxu0 0
    %150 = vmatpush2.bf16.msra.mxu0 0
    %151 = vmatprep.mubr.bf16.mxu0 0
    %152 = vmatmul.mubr.bf16.gmra.mxu0 %v117
    %v153 = vpop.f32.mrf.mxu0
    %v154 = vadd.f32 %v102, %v153
    %v155 = vpop.f32.mrf.mxu0
    %v156 = vpop.f32.mrf.mxu0
    %v157 = vadd.f32 %v102, %v156
    %v158 = vpop.f32.mrf.mxu0
    %159 = vdwg.mxu0
    %v160 = vmax.f32 %v154, 0.0
    %v161 = vmax.f32 %v157, 0.0
    %v162 = vpack.c.bf16 %v161, %v160
    %v163 = vld [vmem:[%s5] sm:$0xf]
    %v164 = vld [vmem:[%s5 + $0x4] sm:$0xf]
    %v165 = vld [vmem:[%s5 + $0x8] sm:$0xf]
    %v166 = vld [vmem:[%s5 + $0xc] sm:$0xf]
    %v167 = vld [vmem:[%s5 + $0x10] sm:$0xf]
    %v168 = vld [vmem:[%s5 + $0x14] sm:$0xf]
    %v169 = vld [vmem:[%s5 + $0x18] sm:$0xf]
    %v170 = vld [vmem:[%s5 + $0x1c] sm:$0xf]
    %v171 = vld [vmem:[%s6] sm:$0x1]
    %v173 = vlaneseq
    %v174 = vshrl.u32 %v173, 7
    %v175 = vsub.s32 0, %v174
    %v176 = vrot.slane %v171, %v175
    %v186 = vunpack.c.l.b16 %v163
    %v187 = vunpack.c.l.b16 %v164
    %v188 = vunpack.c.l.b16 %v165
    %v189 = vunpack.c.l.b16 %v166
    %v190 = vunpack.c.l.b16 %v167
    %v191 = vunpack.c.l.b16 %v168
    %v192 = vunpack.c.l.b16 %v169
    %v193 = vunpack.c.l.b16 %v170
    %v194 = vpack.c.b16 %v187, %v186
    %v195 = vpack.c.b16 %v189, %v188
    %v196 = vpack.c.b16 %v191, %v190
    %v197 = vpack.c.b16 %v193, %v192
    %vm202 = vcmask 523264
    %v204 = vsel %vm202, %v162, 0
    %206 = vmatprep.subr.bf16.mxu0 0
    %207 = vmatpush1.bf16.msra.mxu0 0
    %208 = vmatprep.subr.bf16.mxu0 0
    %209 = vmatpush1.bf16.msra.mxu0 0
    %210 = vmatprep.subr.bf16.mxu0 0
    %211 = vmatpush1.bf16.msra.mxu0 0
    %212 = vmatprep.subr.bf16.mxu0 0
    %213 = vmatpush1.bf16.msra.mxu0 0
    %214 = vmatprep.subr.bf16.mxu0 0
    %215 = vmatpush1.bf16.msra.mxu0 %v197
    %216 = vmatprep.subr.bf16.mxu0 0
    %217 = vmatpush1.bf16.msra.mxu0 %v196
    %218 = vmatprep.subr.bf16.mxu0 0
    %219 = vmatpush1.bf16.msra.mxu0 %v195
    %220 = vmatprep.subr.bf16.mxu0 0
    %221 = vmatpush1.bf16.msra.mxu0 %v194
    %222 = vmatprep.subr.bf16.mxu0 0
    %223 = vmatpush2.bf16.msra.mxu0 0
    %224 = vmatprep.subr.bf16.mxu0 0
    %225 = vmatpush2.bf16.msra.mxu0 0
    %226 = vmatprep.subr.bf16.mxu0 0
    %227 = vmatpush2.bf16.msra.mxu0 0
    %228 = vmatprep.subr.bf16.mxu0 0
    %229 = vmatpush2.bf16.msra.mxu0 0
    %230 = vmatprep.subr.bf16.mxu0 0
    %231 = vmatpush2.bf16.msra.mxu0 0
    %232 = vmatprep.subr.bf16.mxu0 0
    %233 = vmatpush2.bf16.msra.mxu0 0
    %234 = vmatprep.subr.bf16.mxu0 0
    %235 = vmatpush2.bf16.msra.mxu0 0
    %236 = vmatprep.subr.bf16.mxu0 0
    %237 = vmatpush2.bf16.msra.mxu0 0
    %238 = vmatprep.mubr.bf16.mxu0 0
    %239 = vmatmul.mubr.bf16.gmra.mxu0 %v204
    %v240 = vpop.f32.mrf.mxu0
    %v241 = vadd.f32 %v176, %v240
    %v242 = vpop.f32.mrf.mxu0
    %v243 = vpop.f32.mrf.mxu0
    %v244 = vadd.f32 %v176, %v243
    %v245 = vpop.f32.mrf.mxu0
    %246 = vdwg.mxu0
    %v247 = vadd.f32 %v241, %v28
    %v248 = vadd.f32 %v244, %v29
    %249 = vst.msk [vmem:[#allocation2] sm:$0xff] %vm32, %v247
    %250 = vst.msk [vmem:[#allocation2 + $0x8] sm:$0xff] %vm32, %v248
    // Predicated region
    $region30: #{tpu_custom_call.1} parent=1 // pred_check
      _
    $region31: #{tpu_custom_call.1} parent=1 // pred_check_branch
      %252 = sbr.rel (0) target = $region33
    $region32: #{tpu_custom_call.1} parent=1 // pred_region
      %s254 = ssub.s32 256, 256
      %255 = vsyncadd [#allocation3], %s254
      %s256 = sshll.u32 [#allocation2], 4
      %s257 = int_to_ptr.vmem [resolvable:$true] %s256
      %262 = dma.vmem_to_hbm [thread:$0]  %s257, 256, %s7, [#allocation3], 128, 128, 8
    $region33: #{tpu_custom_call.1} parent=1 // pred_fallthru
      _
    // Predicated region
    $region34: #{tpu_custom_call.1} parent=1 // pred_check
      _
    $region35: #{tpu_custom_call.1} parent=1 // pred_check_branch
      %264 = sbr.rel (0) target = $region37
    $region36: #{tpu_custom_call.1} parent=1 // pred_region
      %265 = dma.done [#allocation3], 256
    $region37: #{tpu_custom_call.1} parent=1 // pred_fallthru
      _
    %266 = vsyncpa [#allocation3], 1

</llo_original>
